<compile_context>
chip_gen: v7x
topology: tpu7x:2x2x1
jax: 0.10.0
libtpu: 0.0.40
codegen_flags: <defaults>
</compile_context>

<pallas_src>
import functools

import jax
import jax.numpy as jnp
from jax.experimental import pallas as pl
from jax.experimental.pallas import tpu as pltpu

HIDDEN = 40            # matches nn.Linear(inp_obs_size, 40)
LANE = 128             # TPU lane width
SUBLANE = 8            # f32 sublane height
MAX_BATCH_TILE = 1024  # rows per grid step (tiny VMEM footprint at d_in=32)


def _round_up(x, m):
    return (x + m - 1) // m * m


def _net_kernel(x_ref, w1_ref, b1_ref, w2_ref, b2_ref, o_ref, *, out_dim):
    # fc1: [tB, D_in] @ [D_in, 128] (+bias, ReLU) -- f32 accumulate, f32 VPU work.
    h = jnp.dot(x_ref[...], w1_ref[...], preferred_element_type=jnp.float32)
    h = jnp.maximum(h + b1_ref[...], 0.0)
    # x.view(x.size(0), -1) is a no-op for 2-D activations.
    # fc2: [tB, 128] @ [128, 128] -- lane-dense matmul; cast h to the weight
    # dtype (no-op in f32 mode, bf16 cast in bf16 mode), accumulate in f32.
    q = jnp.dot(h.astype(w2_ref.dtype), w2_ref[...],
                preferred_element_type=jnp.float32)
    q = q + b2_ref[...]
    # Store only the real Q-value lanes (masked vst on a 4-wide block is cheap;
    # writing the 128-lane padded slab to HBM was the dominant traffic).
    o_ref[...] = q[:, :out_dim].astype(o_ref.dtype)


def pad_params(w1, b1, w2, b2):
    """Zero-pad hidden and output feature dims up to multiples of 128 lanes
    (padded columns/rows are mathematically inert)."""
    h_pad = _round_up(w1.shape[1], LANE)
    o_pad = _round_up(w2.shape[1], LANE)
    w1p = jnp.pad(w1, ((0, 0), (0, h_pad - w1.shape[1])))
    b1p = jnp.pad(b1, ((0, 0), (0, h_pad - b1.shape[1])))
    w2p = jnp.pad(w2, ((0, h_pad - w2.shape[0]), (0, o_pad - w2.shape[1])))
    b2p = jnp.pad(b2, ((0, 0), (0, o_pad - b2.shape[1])))
    return w1p, b1p, w2p, b2p


def _choose_batch_tiling(B):
    """Balanced batch tiles: largest tile <= MAX_BATCH_TILE; keep >= 2 tiles
    once the batch is big enough for v7x's two TensorCores to share work."""
    n_tiles = pl.cdiv(B, MAX_BATCH_TILE)
    if B > 512:
        n_tiles = max(n_tiles, 2)       # megacore sharding on v7x
    block_b = _round_up(pl.cdiv(B, n_tiles), SUBLANE)
    return block_b, n_tiles * block_b, n_tiles


def net_forward(x, w1p, b1p, w2p, b2p, out_act_space, *, use_bf16=False):
    """x: [B, inp_obs_size] f32; padded params from pad_params.
    Returns q_vals: [B, out_act_space] f32."""
    B, d_in = x.shape
    h_pad = w1p.shape[1]
    o_pad = w2p.shape[1]

    if use_bf16:
        # Halve the x HBM read / feed the bf16 MXU; accumulation, bias add,
        # ReLU and the stored Q-values stay f32.
        x = x.astype(jnp.bfloat16)
        w1p = w1p.astype(jnp.bfloat16)
        w2p = w2p.astype(jnp.bfloat16)

    block_b, b_pad, n_tiles = _choose_batch_tiling(B)
    if b_pad != B:
        x = jnp.pad(x, ((0, b_pad - B), (0, 0)))

    itemsize = jnp.dtype(x.dtype).itemsize
    cost = pl.CostEstimate(
        flops=2 * b_pad * (d_in * h_pad + h_pad * o_pad),
        transcendentals=0,
        bytes_accessed=(b_pad * d_in * itemsize
                        + (d_in * h_pad + h_pad * o_pad) * itemsize
                        + (h_pad + o_pad) * 4
                        + b_pad * out_act_space * 4),
    )

    out = pl.pallas_call(
        functools.partial(_net_kernel, out_dim=out_act_space),
        out_shape=jax.ShapeDtypeStruct((b_pad, out_act_space), jnp.float32),
        grid=(n_tiles,),
        in_specs=[
            # activations: tile over batch
            pl.BlockSpec((block_b, d_in), lambda i: (i, 0)),
            # weights/biases: constant block index -> stay VMEM-resident
            pl.BlockSpec((d_in, h_pad), lambda i: (0, 0)),
            pl.BlockSpec((1, h_pad), lambda i: (0, 0)),
            pl.BlockSpec((h_pad, o_pad), lambda i: (0, 0)),
            pl.BlockSpec((1, o_pad), lambda i: (0, 0)),
        ],
        # last block dim == full array dim (out_act_space) -> legal, un-padded
        # HBM writeback.
        out_specs=pl.BlockSpec((block_b, out_act_space), lambda i: (i, 0)),
        compiler_params=pltpu.CompilerParams(
            # batch tiles are independent -> shard across TCs on v7x
            dimension_semantics=("parallel",)
        ),
        cost_estimate=cost,
    )(x, w1p, b1p, w2p, b2p)

    # Strip batch padding only (no column slice needed any more).
    return out[:B]


def init_params(key, inp_obs_size, out_act_space, hidden=HIDDEN):
    """Deterministic init mimicking nn.Linear's U(-1/sqrt(fan_in), 1/sqrt(fan_in))."""
    k1, k2, k3, k4 = jax.random.split(key, 4)
    lim1 = 1.0 / jnp.sqrt(jnp.float32(inp_obs_size))
    lim2 = 1.0 / jnp.sqrt(jnp.float32(hidden))
    # Stored as [in, out] (PyTorch weight is [out, in]; forward uses x @ W^T,
    # which equals x @ (our W)).
    w1 = jax.random.uniform(k1, (inp_obs_size, hidden), jnp.float32, -lim1, lim1)
    b1 = jax.random.uniform(k2, (1, hidden), jnp.float32, -lim1, lim1)
    w2 = jax.random.uniform(k3, (hidden, out_act_space), jnp.float32, -lim2, lim2)
    b2 = jax.random.uniform(k4, (1, out_act_space), jnp.float32, -lim2, lim2)
    return w1, b1, w2, b2


if __name__ == "__main__":
    key = jax.random.PRNGKey(0)
    inp_obs_size = 32
    out_act_space = 4

    pkey, xkey1, xkey2, xkey3 = jax.random.split(key, 4)
    w1, b1, w2, b2 = init_params(pkey, inp_obs_size, out_act_space)
    padded = pad_params(w1, b1, w2, b2)

    def ref_forward(x):
        return jnp.maximum(x @ w1 + b1, 0.0) @ w2 + b2

    # Small single-tile batch (like one env step / small replay sample), f32.
    batch = 8
    x_small = jax.random.normal(xkey1, (batch, inp_obs_size), jnp.float32)
    q_small = jax.block_until_ready(net_forward(x_small, *padded, out_act_space))
    assert q_small.shape == (batch, out_act_space)
    assert jnp.allclose(q_small, ref_forward(x_small), atol=1e-5, rtol=1e-5)

    # Non-multiple-of-8 batch: exercises balanced-tile padding (300 -> 304 rows).
    mid_batch = 300
    x_mid = jax.random.normal(xkey2, (mid_batch, inp_obs_size), jnp.float32)
    q_mid = jax.block_until_ready(net_forward(x_mid, *padded, out_act_space))
    assert q_mid.shape == (mid_batch, out_act_space)
    assert jnp.allclose(q_mid, ref_forward(x_mid), atol=1e-5, rtol=1e-5)

    # Batch > 512: two balanced tiles (v7x megacore path) + bf16 input cast.
    big_batch = 600
    x_big = jax.random.normal(xkey3, (big_batch, inp_obs_size), jnp.float32)
    q_big = jax.block_until_ready(
        net_forward(x_big, *padded, out_act_space, use_bf16=True))
    assert q_big.shape == (big_batch, out_act_space)
    assert jnp.allclose(q_big, ref_forward(x_big), atol=5e-2, rtol=5e-2)

    print("KERNEL_OK")
</pallas_src>

<mosaic_0001>
module attributes {stable_mosaic.version = 11 : i64} {
  func.func @_net_kernel(%arg0: i32, %arg1: memref<8x32xf32, #tpu.memory_space<vmem>>, %arg2: memref<32x128xf32, #tpu.memory_space<vmem>>, %arg3: memref<1x128xf32, #tpu.memory_space<vmem>>, %arg4: memref<128x128xf32, #tpu.memory_space<vmem>>, %arg5: memref<1x128xf32, #tpu.memory_space<vmem>>, %arg6: memref<8x4xf32, #tpu.memory_space<vmem>>) attributes {dimension_semantics = [#tpu.dimension_semantics<parallel>], iteration_bounds = array<i64: 1>, scalar_prefetch = 0 : i64, scratch_operands = 0 : i64, tpu.core_type = #tpu.core_type<tc>, window_params = [{transform_indices = @transform_0, window_bounds = array<i64: 8, 32>}, {pipeline_mode = #tpu.pipeline_mode<synchronous>, transform_indices = @transform_1, window_bounds = array<i64: 32, 128>}, {pipeline_mode = #tpu.pipeline_mode<synchronous>, transform_indices = @transform_2, window_bounds = array<i64: 1, 128>}, {pipeline_mode = #tpu.pipeline_mode<synchronous>, transform_indices = @transform_3, window_bounds = array<i64: 128, 128>}, {pipeline_mode = #tpu.pipeline_mode<synchronous>, transform_indices = @transform_4, window_bounds = array<i64: 1, 128>}, {transform_indices = @transform_5, window_bounds = array<i64: 8, 4>}]} {
    %c0 = arith.constant 0 : index
    %c0_0 = arith.constant 0 : index
    %0 = vector.load %arg1[%c0, %c0_0] : memref<8x32xf32, #tpu.memory_space<vmem>>, vector<8x32xf32>
    %c0_1 = arith.constant 0 : index
    %c0_2 = arith.constant 0 : index
    %1 = vector.load %arg2[%c0_1, %c0_2] : memref<32x128xf32, #tpu.memory_space<vmem>>, vector<32x128xf32>
    %cst = arith.constant dense<0.000000e+00> : vector<8x128xf32>
    %2 = tpu.matmul %0, %1, %cst {dimension_numbers = #tpu.dot_dimension_numbers<[1], [0], [0], [1], [0, 0, 1, 1], [], []>} : vector<8x32xf32>, vector<32x128xf32>, vector<8x128xf32> -> vector<8x128xf32>
    %c0_3 = arith.constant 0 : index
    %c0_4 = arith.constant 0 : index
    %3 = vector.load %arg3[%c0_3, %c0_4] : memref<1x128xf32, #tpu.memory_space<vmem>>, vector<1x128xf32>
    %4 = vector.broadcast %3 : vector<1x128xf32> to vector<8x128xf32>
    %5 = arith.addf %2, %4 : vector<8x128xf32>
    %cst_5 = arith.constant 0.000000e+00 : f32
    %6 = vector.broadcast %cst_5 : f32 to vector<8x128xf32>
    %7 = arith.maximumf %5, %6 : vector<8x128xf32>
    %c0_6 = arith.constant 0 : index
    %c0_7 = arith.constant 0 : index
    %8 = vector.load %arg4[%c0_6, %c0_7] : memref<128x128xf32, #tpu.memory_space<vmem>>, vector<128x128xf32>
    %cst_8 = arith.constant dense<0.000000e+00> : vector<8x128xf32>
    %9 = tpu.matmul %7, %8, %cst_8 {dimension_numbers = #tpu.dot_dimension_numbers<[1], [0], [0], [1], [0, 0, 1, 1], [], []>} : vector<8x128xf32>, vector<128x128xf32>, vector<8x128xf32> -> vector<8x128xf32>
    %c0_9 = arith.constant 0 : index
    %c0_10 = arith.constant 0 : index
    %10 = vector.load %arg5[%c0_9, %c0_10] : memref<1x128xf32, #tpu.memory_space<vmem>>, vector<1x128xf32>
    %11 = vector.broadcast %10 : vector<1x128xf32> to vector<8x128xf32>
    %12 = arith.addf %9, %11 : vector<8x128xf32>
    %13 = vector.extract_strided_slice %12 {offsets = [0, 0], sizes = [8, 4], strides = [1, 1]} : vector<8x128xf32> to vector<8x4xf32>
    %c0_11 = arith.constant 0 : index
    %c0_12 = arith.constant 0 : index
    %14 = vector.load %arg6[%c0_11, %c0_12] : memref<8x4xf32, #tpu.memory_space<vmem>>, vector<8x4xf32>
    tpu.vector_store %arg6[%c0_11, %c0_12], %13 {strides = array<i32>} : memref<8x4xf32, #tpu.memory_space<vmem>>, vector<8x4xf32>,
    return
  }
  func.func @transform_0(%arg0: i32) -> (i32, i32) {
    %c0_i32 = arith.constant 0 : i32
    %c0_i32_0 = arith.constant 0 : i32
    return %arg0, %c0_i32 : i32, i32
  }
  func.func @transform_1(%arg0: i32) -> (i32, i32) {
    %c0_i32 = arith.constant 0 : i32
    %c0_i32_0 = arith.constant 0 : i32
    %c0_i32_1 = arith.constant 0 : i32
    return %c0_i32, %c0_i32_0 : i32, i32
  }
  func.func @transform_2(%arg0: i32) -> (i32, i32) {
    %c0_i32 = arith.constant 0 : i32
    %c0_i32_0 = arith.constant 0 : i32
    %c0_i32_1 = arith.constant 0 : i32
    return %c0_i32, %c0_i32_0 : i32, i32
  }
  func.func @transform_3(%arg0: i32) -> (i32, i32) {
    %c0_i32 = arith.constant 0 : i32
    %c0_i32_0 = arith.constant 0 : i32
    %c0_i32_1 = arith.constant 0 : i32
    return %c0_i32, %c0_i32_0 : i32, i32
  }
  func.func @transform_4(%arg0: i32) -> (i32, i32) {
    %c0_i32 = arith.constant 0 : i32
    %c0_i32_0 = arith.constant 0 : i32
    %c0_i32_1 = arith.constant 0 : i32
    return %c0_i32, %c0_i32_0 : i32, i32
  }
  func.func @transform_5(%arg0: i32) -> (i32, i32) {
    %c0_i32 = arith.constant 0 : i32
    %c0_i32_0 = arith.constant 0 : i32
    return %arg0, %c0_i32 : i32, i32
  }
}

</mosaic_0001>

<llo_original>
// kernel: tpu_custom_call.1
$region0: #{tpu_custom_call.1}
  #allocation0 [shape = 'u32[]', space=smem, size = 0x4, offset = 0x4, fixed_abs, tag = 'smem constant byte address 0x4 - core index']
  #allocation1 [shape = 'u32[144,128]{1,0:T(1,128)}', space=vmem, size = 0x12000, scoped, tag = 'internal scratch']
  %s0 = inlined_call_operand.hbm [shape: f32[8,32], index: 0, kind: input, shape index: {}]
  %s1 = inlined_call_operand.hbm [shape: f32[32,128], index: 1, kind: input, shape index: {}]
  %s2 = inlined_call_operand.vmem [shape: f32[1,128], index: 2, kind: input, shape index: {}]
  %s3 = inlined_call_operand.hbm [shape: f32[128,128], index: 3, kind: input, shape index: {}]
  %s4 = inlined_call_operand.vmem [shape: f32[1,128], index: 4, kind: input, shape index: {}]
  %s5 = inlined_call_operand.vmem [shape: f32[8,4], index: 5, kind: output, shape index: {}]
  %s6 = sld [smem:[#allocation0]]
  $region42: #{tpu_custom_call.1} parent=0
    _
  %s8 = ssub.s32 1, %s6
  %s9 = scalar_select 0, %s8, %s6
  $region1: #{tpu_custom_call.1} parent=0
    #allocation2 [shape = 'u8[4096]{0}', space=vmem, size = 0x1000, scoped, tag = 'input window, operand 0, single buffered']
    #allocation3 [shape = 's32[1]{0}', space=sflag, size = 0x4, scoped, tag = 'scoped memory for tpu_custom_call.1']
    #allocation4 [shape = 'u8[16384]{0}', space=vmem, size = 0x4000, scoped, tag = 'input window, operand 1, single buffered']
    #allocation5 [shape = 's32[1]{0}', space=sflag, size = 0x4, scoped, tag = 'scoped memory for tpu_custom_call.1']
    #allocation6 [shape = 'u8[65536]{0}', space=vmem, size = 0x10000, scoped, tag = 'input window, operand 3, single buffered']
    %10 = vsyncpa [#allocation3], 0
    %11 = vsyncpa [#allocation5], 0
    // Predicated region
    $region2: #{tpu_custom_call.1} parent=1 // pred_check
      _
    $region3: #{tpu_custom_call.1} parent=1 // pred_check_branch
      %13 = sbr.rel (0) target = $region5
    $region4: #{tpu_custom_call.1} parent=1 // pred_region
      %s15 = ssub.s32 128, 128
      %16 = vsyncadd [#allocation3], %s15
      %s18 = sshll.u32 [#allocation2], 4
      %s19 = int_to_ptr.vmem [resolvable:$true] %s18
      %21 = dma.hbm_to_vmem [thread:$0]  %s0, 128, %s19, [#allocation3]
    $region5: #{tpu_custom_call.1} parent=1 // pred_fallthru
      _
    // Predicated region
    $region6: #{tpu_custom_call.1} parent=1 // pred_check
      _
    $region7: #{tpu_custom_call.1} parent=1 // pred_check_branch
      %23 = sbr.rel (0) target = $region9
    $region8: #{tpu_custom_call.1} parent=1 // pred_region
      %s25 = ssub.s32 512, 512
      %26 = vsyncadd [#allocation5], %s25
      %s27 = sshll.u32 [#allocation4], 4
      %s28 = int_to_ptr.vmem [resolvable:$true] %s27
      %33 = dma.hbm_to_vmem [thread:$0]  %s1, 512, %s28, [#allocation5], 128, 128, 8
    $region9: #{tpu_custom_call.1} parent=1 // pred_fallthru
      _
    // Predicated region
    $region10: #{tpu_custom_call.1} parent=1 // pred_check
      _
    $region11: #{tpu_custom_call.1} parent=1 // pred_check_branch
      %35 = sbr.rel (0) target = $region13
    $region12: #{tpu_custom_call.1} parent=1 // pred_region
      _
    $region13: #{tpu_custom_call.1} parent=1 // pred_fallthru
      _
    // Predicated region
    $region14: #{tpu_custom_call.1} parent=1 // pred_check
      _
    $region15: #{tpu_custom_call.1} parent=1 // pred_check_branch
      %37 = sbr.rel (0) target = $region17
    $region16: #{tpu_custom_call.1} parent=1 // pred_region
      %s39 = ssub.s32 2048, 2048
      %40 = vsyncadd [#allocation5], %s39
      %s41 = sshll.u32 [#allocation6], 4
      %s42 = int_to_ptr.vmem [resolvable:$true] %s41
      %47 = dma.hbm_to_vmem [thread:$0]  %s3, 2048, %s42, [#allocation5], 128, 128, 8
    $region17: #{tpu_custom_call.1} parent=1 // pred_fallthru
      _
    // Predicated region
    $region18: #{tpu_custom_call.1} parent=1 // pred_check
      _
    $region19: #{tpu_custom_call.1} parent=1 // pred_check_branch
      %49 = sbr.rel (0) target = $region21
    $region20: #{tpu_custom_call.1} parent=1 // pred_region
      _
    $region21: #{tpu_custom_call.1} parent=1 // pred_fallthru
      _
    // Predicated region
    $region22: #{tpu_custom_call.1} parent=1 // pred_check
      _
    $region23: #{tpu_custom_call.1} parent=1 // pred_check_branch
      %51 = sbr.rel (0) target = $region25
    $region24: #{tpu_custom_call.1} parent=1 // pred_region
      %52 = dma.done [#allocation3], 128
    $region25: #{tpu_custom_call.1} parent=1 // pred_fallthru
      _
    // Predicated region
    $region26: #{tpu_custom_call.1} parent=1 // pred_check
      _
    $region27: #{tpu_custom_call.1} parent=1 // pred_check_branch
      %54 = sbr.rel (0) target = $region29
    $region28: #{tpu_custom_call.1} parent=1 // pred_region
      %55 = dma.done [#allocation5], 512
    $region29: #{tpu_custom_call.1} parent=1 // pred_fallthru
      _
    // Predicated region
    $region30: #{tpu_custom_call.1} parent=1 // pred_check
      _
    $region31: #{tpu_custom_call.1} parent=1 // pred_check_branch
      %57 = sbr.rel (0) target = $region33
    $region32: #{tpu_custom_call.1} parent=1 // pred_region
      %58 = dma.done [#allocation5], 2048
    $region33: #{tpu_custom_call.1} parent=1 // pred_fallthru
      _
    %v59 = vld [vmem:[#allocation2] sm:$0xff]
    %v60 = vld [vmem:[#allocation4] sm:$0xff]
    %v61 = vld [vmem:[#allocation4 + $0x8] sm:$0xff]
    %v62 = vld [vmem:[#allocation4 + $0x10] sm:$0xff]
    %v63 = vld [vmem:[#allocation4 + $0x18] sm:$0xff]
    %v64 = vld [vmem:[%s2] sm:$0x1]
    %v66 = vlaneseq
    %v67 = vshrl.u32 %v66, 7
    %v68 = vsub.s32 0, %v67
    %v69 = vrot.slane %v64, %v68
    %vm71 = vcmask 261120
    %v73 = vsel %vm71, %v59, 0
    %75 = vmatprep.subr.mxu0 0.0
    %76 = vmatpush1.msra.mxu0 %v60
    %77 = vmatprep.subr.mxu0 0.0
    %78 = vmatpush1.msra.mxu0 %v61
    %79 = vmatprep.subr.mxu0 0.0
    %80 = vmatpush1.msra.mxu0 %v62
    %81 = vmatprep.subr.mxu0 0.0
    %82 = vmatpush1.msra.mxu0 %v63
    %83 = vmatprep.subr.mxu0 0.0
    %84 = vmatpush1.msra.mxu0 0.0
    %85 = vmatprep.subr.mxu0 0.0
    %86 = vmatpush1.msra.mxu0 0.0
    %87 = vmatprep.subr.mxu0 0.0
    %88 = vmatpush1.msra.mxu0 0.0
    %89 = vmatprep.subr.mxu0 0.0
    %90 = vmatpush1.msra.mxu0 0.0
    %91 = vmatprep.subr.mxu0 0.0
    %92 = vmatpush1.msra.mxu0 0.0
    %93 = vmatprep.subr.mxu0 0.0
    %94 = vmatpush1.msra.mxu0 0.0
    %95 = vmatprep.subr.mxu0 0.0
    %96 = vmatpush1.msra.mxu0 0.0
    %97 = vmatprep.subr.mxu0 0.0
    %98 = vmatpush1.msra.mxu0 0.0
    %99 = vmatprep.subr.mxu0 0.0
    %100 = vmatpush1.msra.mxu0 0.0
    %101 = vmatprep.subr.mxu0 0.0
    %102 = vmatpush1.msra.mxu0 0.0
    %103 = vmatprep.subr.mxu0 0.0
    %104 = vmatpush1.msra.mxu0 0.0
    %105 = vmatprep.subr.mxu0 0.0
    %106 = vmatpush1.msra.mxu0 0.0
    %107 = vmatprep.subr.mxu0 0.0
    %108 = vmatpush1.msra.mxu0 0.0
    %109 = vmatprep.subr.mxu0 0.0
    %110 = vmatpush1.msra.mxu0 0.0
    %111 = vmatprep.subr.mxu0 0.0
    %112 = vmatpush1.msra.mxu0 0.0
    %113 = vmatprep.subr.mxu0 0.0
    %114 = vmatpush1.msra.mxu0 0.0
    %115 = vmatprep.subr.mxu0 0.0
    %116 = vmatpush1.msra.mxu0 0.0
    %117 = vmatprep.subr.mxu0 0.0
    %118 = vmatpush1.msra.mxu0 0.0
    %119 = vmatprep.subr.mxu0 0.0
    %120 = vmatpush1.msra.mxu0 0.0
    %121 = vmatprep.subr.mxu0 0.0
    %122 = vmatpush1.msra.mxu0 0.0
    %123 = vmatprep.subr.mxu0 0.0
    %124 = vmatpush1.msra.mxu0 0.0
    %125 = vmatprep.subr.mxu0 0.0
    %126 = vmatpush1.msra.mxu0 0.0
    %127 = vmatprep.subr.mxu0 0.0
    %128 = vmatpush1.msra.mxu0 0.0
    %129 = vmatprep.subr.mxu0 0.0
    %130 = vmatpush1.msra.mxu0 0.0
    %131 = vmatprep.subr.mxu0 0.0
    %132 = vmatpush1.msra.mxu0 0.0
    %133 = vmatprep.subr.mxu0 0.0
    %134 = vmatpush1.msra.mxu0 0.0
    %135 = vmatprep.subr.mxu0 0.0
    %136 = vmatpush1.msra.mxu0 0.0
    %137 = vmatprep.subr.mxu0 0.0
    %138 = vmatpush1.msra.mxu0 0.0
    %139 = vmatprep.mubr.f32.mxu0 0.0
    %140 = vmatmul.mubr.f32.gmra.mrb[0].mxu0 %v73
    %v141 = vpop.f32.mrb[0].mxu0
    %v142 = vadd.f32 %v69, %v141
    %v143 = vpop.f32.mrb[0].mxu0
    %144 = vdwg.mxu0
    %v145 = vmax.f32 %v142, 0.0
    %v146 = vld [vmem:[#allocation6] sm:$0xff]
    %v147 = vld [vmem:[#allocation6 + $0x8] sm:$0xff]
    %v148 = vld [vmem:[#allocation6 + $0x10] sm:$0xff]
    %v149 = vld [vmem:[#allocation6 + $0x18] sm:$0xff]
    %v150 = vld [vmem:[#allocation6 + $0x20] sm:$0xff]
    %v151 = vld [vmem:[#allocation6 + $0x28] sm:$0xff]
    %v152 = vld [vmem:[#allocation6 + $0x30] sm:$0xff]
    %v153 = vld [vmem:[#allocation6 + $0x38] sm:$0xff]
    %v154 = vld [vmem:[#allocation6 + $0x40] sm:$0xff]
    %v155 = vld [vmem:[#allocation6 + $0x48] sm:$0xff]
    %v156 = vld [vmem:[#allocation6 + $0x50] sm:$0xff]
    %v157 = vld [vmem:[#allocation6 + $0x58] sm:$0xff]
    %v158 = vld [vmem:[#allocation6 + $0x60] sm:$0xff]
    %v159 = vld [vmem:[#allocation6 + $0x68] sm:$0xff]
    %v160 = vld [vmem:[#allocation6 + $0x70] sm:$0xff]
    %v161 = vld [vmem:[#allocation6 + $0x78] sm:$0xff]
    %v162 = vld [vmem:[%s4] sm:$0x1]
    %v164 = vlaneseq
    %v165 = vshrl.u32 %v164, 7
    %v166 = vsub.s32 0, %v165
    %v167 = vrot.slane %v162, %v166
    %169 = vmatprep.subr.mxu0 0.0
    %170 = vmatpush1.msra.mxu0 %v146
    %171 = vmatprep.subr.mxu0 0.0
    %172 = vmatpush1.msra.mxu0 %v147
    %173 = vmatprep.subr.mxu0 0.0
    %174 = vmatpush1.msra.mxu0 %v148
    %175 = vmatprep.subr.mxu0 0.0
    %176 = vmatpush1.msra.mxu0 %v149
    %177 = vmatprep.subr.mxu0 0.0
    %178 = vmatpush1.msra.mxu0 %v150
    %179 = vmatprep.subr.mxu0 0.0
    %180 = vmatpush1.msra.mxu0 %v151
    %181 = vmatprep.subr.mxu0 0.0
    %182 = vmatpush1.msra.mxu0 %v152
    %183 = vmatprep.subr.mxu0 0.0
    %184 = vmatpush1.msra.mxu0 %v153
    %185 = vmatprep.subr.mxu0 0.0
    %186 = vmatpush1.msra.mxu0 %v154
    %187 = vmatprep.subr.mxu0 0.0
    %188 = vmatpush1.msra.mxu0 %v155
    %189 = vmatprep.subr.mxu0 0.0
    %190 = vmatpush1.msra.mxu0 %v156
    %191 = vmatprep.subr.mxu0 0.0
    %192 = vmatpush1.msra.mxu0 %v157
    %193 = vmatprep.subr.mxu0 0.0
    %194 = vmatpush1.msra.mxu0 %v158
    %195 = vmatprep.subr.mxu0 0.0
    %196 = vmatpush1.msra.mxu0 %v159
    %197 = vmatprep.subr.mxu0 0.0
    %198 = vmatpush1.msra.mxu0 %v160
    %199 = vmatprep.subr.mxu0 0.0
    %200 = vmatpush1.msra.mxu0 %v161
    %201 = vmatprep.subr.mxu0 0.0
    %202 = vmatpush1.msra.mxu0 0.0
    %203 = vmatprep.subr.mxu0 0.0
    %204 = vmatpush1.msra.mxu0 0.0
    %205 = vmatprep.subr.mxu0 0.0
    %206 = vmatpush1.msra.mxu0 0.0
    %207 = vmatprep.subr.mxu0 0.0
    %208 = vmatpush1.msra.mxu0 0.0
    %209 = vmatprep.subr.mxu0 0.0
    %210 = vmatpush1.msra.mxu0 0.0
    %211 = vmatprep.subr.mxu0 0.0
    %212 = vmatpush1.msra.mxu0 0.0
    %213 = vmatprep.subr.mxu0 0.0
    %214 = vmatpush1.msra.mxu0 0.0
    %215 = vmatprep.subr.mxu0 0.0
    %216 = vmatpush1.msra.mxu0 0.0
    %217 = vmatprep.subr.mxu0 0.0
    %218 = vmatpush1.msra.mxu0 0.0
    %219 = vmatprep.subr.mxu0 0.0
    %220 = vmatpush1.msra.mxu0 0.0
    %221 = vmatprep.subr.mxu0 0.0
    %222 = vmatpush1.msra.mxu0 0.0
    %223 = vmatprep.subr.mxu0 0.0
    %224 = vmatpush1.msra.mxu0 0.0
    %225 = vmatprep.subr.mxu0 0.0
    %226 = vmatpush1.msra.mxu0 0.0
    %227 = vmatprep.subr.mxu0 0.0
    %228 = vmatpush1.msra.mxu0 0.0
    %229 = vmatprep.subr.mxu0 0.0
    %230 = vmatpush1.msra.mxu0 0.0
    %231 = vmatprep.subr.mxu0 0.0
    %232 = vmatpush1.msra.mxu0 0.0
    %233 = vmatprep.mubr.f32.mxu0 0.0
    %234 = vmatmul.mubr.f32.gmra.mrb[0].mxu0 %v145
    %v235 = vpop.f32.mrb[0].mxu0
    %v236 = vadd.f32 %v167, %v235
    %v237 = vpop.f32.mrb[0].mxu0
    %238 = vdwg.mxu0
    %vm239 = vcmask 31744
    %240 = vst.msk [vmem:[%s5] sm:$0xff] %vm239, %v236
    // Predicated region
    $region34: #{tpu_custom_call.1} parent=1 // pred_check
      _
    $region35: #{tpu_custom_call.1} parent=1 // pred_check_branch
      %242 = sbr.rel (0) target = $region37
    $region36: #{tpu_custom_call.1} parent=1 // pred_region
      _
    $region37: #{tpu_custom_call.1} parent=1 // pred_fallthru
      _
    // Predicated region
    $region38: #{tpu_custom_call.1} parent=1 // pred_check
      _
    $region39: #{tpu_custom_call.1} parent=1 // pred_check_branch
      %244 = sbr.rel (0) target = $region41
    $region40: #{tpu_custom_call.1} parent=1 // pred_region
      _
    $region41: #{tpu_custom_call.1} parent=1 // pred_fallthru
      _
    %245 = vsyncpa [#allocation3], 1
    %246 = vsyncpa [#allocation5], 1

</llo_original>
